<compile_context>
chip_gen: v6e
topology: v6e:2x2x1
jax: 0.10.0
libtpu: 0.0.40
codegen_flags: <defaults>
</compile_context>

<pallas_src>
import numpy as np

import jax
import jax.numpy as jnp
from jax import lax
from jax.experimental import pallas as pl
from jax.experimental.pallas import tpu as pltpu

_LANES = 128
_CHUNK_ROWS = 1024   # in-kernel accumulation slab (~0.5 MiB f32 temps)


def _round_up(x, m):
    return -(-x // m) * m


def _sublane_multiple(dtype) -> int:
    """Required second-to-last block-dim multiple for this dtype's packing."""
    itemsize = jnp.dtype(dtype).itemsize
    return 8 * max(1, 4 // itemsize)   # f32 -> 8, bf16 -> 16, int8 -> 32


def _chip_config():
    """(num_splits, max f32 rows per block, VMEM limit cap in bytes)."""
    kind = ""
    try:
        kind = jax.devices()[0].device_kind.lower()
    except Exception:
        pass
    if "v7" in kind:    # 2 TensorCores, 64 MiB VMEM/TC, ~3.2 TB/s HBM
        return 2, 8192, 48 << 20
    if "v6" in kind:    # 1 TensorCore, 128 MiB VMEM
        return 1, 8192, 100 << 20
    if "v5" in kind:    # 1 TensorCore, 128 MiB VMEM, lower HBM BW
        return 1, 4096, 100 << 20
    return 1, 4096, 48 << 20   # unknown generation: conservative


def _make_ssd_kernel(block_rows, chunk_rows, n_chunks, bpc, rows,
                     needs_mask, multi_split):
    """Sum of squared differences folded per-lane into a resident (8,128) block."""
    lanes = _LANES

    def kernel(*refs):
        if multi_split:
            _bmap, y_ref, yhat_ref, out_ref = refs   # bmap only used by index_maps
            c = pl.program_id(0)
            j = pl.program_id(1)
        else:
            y_ref, yhat_ref, out_ref = refs
            c = 0
            j = pl.program_id(0)

        @pl.when(j == 0)
        def _():
            out_ref[...] = jnp.zeros_like(out_ref)

        base = (c * bpc + j) * block_rows   # logical first row of this block

        def fold(ys, yh, offset, apply_mask):
            # Read native dtype, widen in-register (VPU only).
            d = yh.astype(jnp.float32) - ys.astype(jnp.float32)
            sq = d * d
            if apply_mask:
                row = lax.broadcasted_iota(jnp.int32, (chunk_rows, lanes), 0)
                sq = jnp.where(row + (base + offset) < rows, sq,
                               jnp.float32(0.0))
            # Fold the slab down to one (8, lanes) partial (pure vreg adds).
            return jnp.sum(sq.reshape(chunk_rows // 8, 8, lanes), axis=0)

        def accumulate(apply_mask):
            if n_chunks == 1:
                return fold(y_ref[...], yhat_ref[...], 0, apply_mask)

            def body(ci, acc):
                start = pl.multiple_of(ci * chunk_rows, chunk_rows)
                return acc + fold(y_ref[pl.ds(start, chunk_rows), :],
                                  yhat_ref[pl.ds(start, chunk_rows), :],
                                  ci * chunk_rows, apply_mask)

            return lax.fori_loop(0, n_chunks, body,
                                 jnp.zeros((8, lanes), jnp.float32),
                                 unroll=True)

        if needs_mask:
            valid = rows - base   # may be <= 0 for phantom blocks of the split

            @pl.when(valid >= block_rows)      # full block: mask-free fast path
            def _():
                out_ref[...] += accumulate(False)

            @pl.when(valid < block_rows)       # ragged tail / phantom block
            def _():
                out_ref[...] += accumulate(True)
        else:
            out_ref[...] += accumulate(False)

    return kernel


def rmse_loss(y, yhat):
    """loss = sqrt(sum((yhat - y)**2) / y.shape[0])  (scalar f32)."""
    assert y.shape == yhat.shape, (y.shape, yhat.shape)
    batch = y.shape[0]

    yf = jnp.ravel(y)
    yhf = jnp.ravel(yhat)
    n = yf.shape[0]

    # Lane tail: pad only to the next multiple of 128 (<=127 zeros; exact for
    # sum-of-squares). Typical NN shapes (numel % 128 == 0) need no copy.
    rem = n % _LANES
    if rem:
        pad = _LANES - rem
        yf = jnp.pad(yf, (0, pad))
        yhf = jnp.pad(yhf, (0, pad))
    rows = yf.shape[0] // _LANES

    if rows == 0:   # degenerate tiny input (< 128 elements): pure JAX
        d = yhf.astype(jnp.float32) - yf.astype(jnp.float32)
        return jnp.sqrt(jnp.sum(d * d) / jnp.float32(batch))

    y2d = yf.reshape(rows, _LANES)
    yh2d = yhf.reshape(rows, _LANES)

    cfg_splits, max_rows_f32, vmem_cap = _chip_config()

    itemsize = max(jnp.dtype(y2d.dtype).itemsize, jnp.dtype(yh2d.dtype).itemsize)
    mult = max(_sublane_multiple(y2d.dtype), _sublane_multiple(yh2d.dtype))

    # Dtype-scaled block size so HBM bytes per grid step stay constant.
    max_rows = max_rows_f32 * max(1, 4 // itemsize)

    # Round the block to the chunk size so the in-kernel accumulation can tile
    # it with constant-size slabs (the mask covers any extra rows).
    unit = _CHUNK_ROWS if rows >= _CHUNK_ROWS else mult
    block_rows = min(max_rows, _round_up(rows, unit))
    chunk_rows = _CHUNK_ROWS if block_rows > _CHUNK_ROWS else block_rows
    n_chunks = block_rows // chunk_rows

    total_blocks = -(-rows // block_rows)
    num_splits = min(cfg_splits, total_blocks)   # never more splits than blocks
    bpc = -(-total_blocks // num_splits)         # blocks per split
    needs_mask = (num_splits * bpc * block_rows) != rows
    multi_split = num_splits > 1

    # 2 inputs x 2 pipeline buffers + chunk temps / output / slack, per-gen cap.
    block_bytes = block_rows * _LANES * itemsize
    vmem_limit = int(min(vmem_cap, max(4 * block_bytes + (8 << 20), 32 << 20)))

    kernel = _make_ssd_kernel(block_rows, chunk_rows, n_chunks, bpc, rows,
                              needs_mask, multi_split)
    out_shape = jax.ShapeDtypeStruct((num_splits * 8, _LANES), jnp.float32)

    if multi_split:
        # Clamped logical->physical block table (SMEM scalar prefetch) so DMAs
        # for phantom blocks created by the core split never start OOB; the
        # in-kernel mask zeroes their contribution.
        block_map = jnp.asarray(
            np.minimum(np.arange(num_splits * bpc, dtype=np.int32),
                       np.int32(total_blocks - 1)))
        in_map = lambda c, j, bm: (bm[c * bpc + j], 0)
        grid_spec = pltpu.PrefetchScalarGridSpec(
            num_scalar_prefetch=1,
            grid=(num_splits, bpc),
            in_specs=[pl.BlockSpec((block_rows, _LANES), in_map),
                      pl.BlockSpec((block_rows, _LANES), in_map)],
            out_specs=pl.BlockSpec((8, _LANES), lambda c, j, bm: (c, 0)),
        )
        dim_sem = ("parallel", "arbitrary")
        args = (block_map, y2d, yh2d)
    else:
        in_map = lambda j: (j, 0)
        grid_spec = pltpu.PrefetchScalarGridSpec(
            num_scalar_prefetch=0,
            grid=(bpc,),
            in_specs=[pl.BlockSpec((block_rows, _LANES), in_map),
                      pl.BlockSpec((block_rows, _LANES), in_map)],
            out_specs=pl.BlockSpec((8, _LANES), lambda j: (0, 0)),
        )
        dim_sem = ("arbitrary",)
        args = (y2d, yh2d)

    partials = pl.pallas_call(
        kernel,
        out_shape=out_shape,
        grid_spec=grid_spec,
        compiler_params=pltpu.CompilerParams(
            dimension_semantics=dim_sem,
            vmem_limit_bytes=vmem_limit,
        ),
    )(*args)

    # Glue: one tiny cross-lane reduce + scalar math.
    ssd = jnp.sum(partials)
    # TODO(synk): the module's eps is unused in its forward, so it is ignored.
    return jnp.sqrt(ssd / jnp.float32(batch))


if __name__ == "__main__":
    key = jax.random.PRNGKey(0)

    def ref_loss(y, yhat):
        d = yhat.astype(jnp.float32) - y.astype(jnp.float32)
        return jnp.sqrt(jnp.sum(d * d) / y.shape[0])

    # 1) Small NCHW-style input, consistent with a generic regression target.
    k1, k2, key = jax.random.split(key, 3)[0], jax.random.split(key, 3)[1], jax.random.split(key, 3)[2]
    y = jax.random.uniform(k1, (2, 4, 16, 16), dtype=jnp.float32) + 0.5
    yhat = y + 0.1 * jax.random.normal(k2, (2, 4, 16, 16), dtype=jnp.float32)
    loss = rmse_loss(y, yhat)
    jax.block_until_ready(loss)
    assert jnp.allclose(loss, ref_loss(y, yhat), rtol=1e-5, atol=1e-6), (
        loss, ref_loss(y, yhat))

    # 2) Ragged medium input (exercises the chunked + masked paths).
    k1, k2, key = jax.random.split(key, 3)
    y2 = jax.random.normal(k1, (5, 7, 97, 101), dtype=jnp.float32)
    yh2 = y2 + 0.05 * jax.random.normal(k2, (5, 7, 97, 101), dtype=jnp.float32)
    loss2 = rmse_loss(y2, yh2)
    jax.block_until_ready(loss2)
    assert jnp.allclose(loss2, ref_loss(y2, yh2), rtol=1e-4, atol=1e-6), (
        loss2, ref_loss(y2, yh2))

    # 3) Multi-block input (exercises grid accumulation and, on v7x, the
    #    2-way core split with its clamped phantom block).
    k1, k2 = jax.random.split(key)
    y3 = jax.random.normal(k1, (16, 100000), dtype=jnp.float32)
    yh3 = y3 + 0.05 * jax.random.normal(k2, (16, 100000), dtype=jnp.float32)
    loss3 = rmse_loss(y3, yh3)
    jax.block_until_ready(loss3)
    assert jnp.allclose(loss3, ref_loss(y3, yh3), rtol=5e-4, atol=1e-6), (
        loss3, ref_loss(y3, yh3))

    print("KERNEL_OK")
</pallas_src>

<mosaic_0001>
module attributes {stable_mosaic.version = 11 : i64} {
  func.func @kernel(%arg0: i32, %arg1: memref<16x128xf32, #tpu.memory_space<vmem>>, %arg2: memref<16x128xf32, #tpu.memory_space<vmem>>, %arg3: memref<8x128xf32, #tpu.memory_space<vmem>>) attributes {dimension_semantics = [#tpu.dimension_semantics<arbitrary>], iteration_bounds = array<i64: 1>, scalar_prefetch = 0 : i64, scratch_operands = 0 : i64, tpu.core_type = #tpu.core_type<tc>, window_params = [{transform_indices = @transform_0, window_bounds = array<i64: 16, 128>}, {transform_indices = @transform_1, window_bounds = array<i64: 16, 128>}, {pipeline_mode = #tpu.pipeline_mode<synchronous>, transform_indices = @transform_2, window_bounds = array<i64: 8, 128>}]} {
    %c0_i32 = arith.constant 0 : i32
    %0 = arith.cmpi eq, %arg0, %c0_i32 : i32
    %1 = arith.extui %0 : i1 to i32
    %c0_i32_0 = arith.constant 0 : i32
    %2 = arith.cmpi ne, %1, %c0_i32_0 : i32
    scf.if %2 {
      %cst_8 = arith.constant 0.000000e+00 : f32
      %12 = vector.broadcast %cst_8 : f32 to vector<8x128xf32>
      %c0_9 = arith.constant 0 : index
      %c0_10 = arith.constant 0 : index
      %13 = vector.load %arg3[%c0_9, %c0_10] : memref<8x128xf32, #tpu.memory_space<vmem>>, vector<8x128xf32>
      tpu.vector_store %arg3[%c0_9, %c0_10], %12 {strides = array<i32>} : memref<8x128xf32, #tpu.memory_space<vmem>>, vector<8x128xf32>,
    } else {
    }
    %c0 = arith.constant 0 : index
    %c0_1 = arith.constant 0 : index
    %3 = vector.load %arg3[%c0, %c0_1] : memref<8x128xf32, #tpu.memory_space<vmem>>, vector<8x128xf32>
    %c0_2 = arith.constant 0 : index
    %c0_3 = arith.constant 0 : index
    %4 = vector.load %arg1[%c0_2, %c0_3] : memref<16x128xf32, #tpu.memory_space<vmem>>, vector<16x128xf32>
    %c0_4 = arith.constant 0 : index
    %c0_5 = arith.constant 0 : index
    %5 = vector.load %arg2[%c0_4, %c0_5] : memref<16x128xf32, #tpu.memory_space<vmem>>, vector<16x128xf32>
    %6 = arith.subf %5, %4 : vector<16x128xf32>
    %7 = arith.mulf %6, %6 : vector<16x128xf32>
    %8 = vector.shape_cast %7 : vector<16x128xf32> to vector<2x8x128xf32>
    %cst = arith.constant dense<0.000000e+00> : vector<8x128xf32>
    %9 = vector.multi_reduction <add>, %8, %cst [0] : vector<2x8x128xf32> to vector<8x128xf32>
    %10 = arith.addf %3, %9 : vector<8x128xf32>
    %c0_6 = arith.constant 0 : index
    %c0_7 = arith.constant 0 : index
    %11 = vector.load %arg3[%c0_6, %c0_7] : memref<8x128xf32, #tpu.memory_space<vmem>>, vector<8x128xf32>
    tpu.vector_store %arg3[%c0_6, %c0_7], %10 {strides = array<i32>} : memref<8x128xf32, #tpu.memory_space<vmem>>, vector<8x128xf32>,
    return
  }
  func.func @transform_0(%arg0: i32) -> (i32, i32) {
    %c0_i32 = arith.constant 0 : i32
    %c0_i32_0 = arith.constant 0 : i32
    return %arg0, %c0_i32 : i32, i32
  }
  func.func @transform_1(%arg0: i32) -> (i32, i32) {
    %c0_i32 = arith.constant 0 : i32
    %c0_i32_0 = arith.constant 0 : i32
    return %arg0, %c0_i32 : i32, i32
  }
  func.func @transform_2(%arg0: i32) -> (i32, i32) {
    %c0_i32 = arith.constant 0 : i32
    %c0_i32_0 = arith.constant 0 : i32
    %c0_i32_1 = arith.constant 0 : i32
    return %c0_i32, %c0_i32_0 : i32, i32
  }
}

</mosaic_0001>

<llo_original>
// kernel: tpu_custom_call.1
$region0: #{tpu_custom_call.1}
  #allocation0 [shape = 'u32[]', space=smem, size = 0x4, offset = 0x4, fixed_abs, tag = 'smem constant byte address 0x4 - core index']
  #allocation1 [shape = 'u32[144,128]{1,0:T(1,128)}', space=vmem, size = 0x12000, scoped, tag = 'internal scratch']
  %s0 = inlined_call_operand.hbm [shape: f32[16,128], index: 0, kind: input, shape index: {}]
  %s1 = inlined_call_operand.hbm [shape: f32[16,128], index: 1, kind: input, shape index: {}]
  %s2 = inlined_call_operand.hbm [shape: f32[8,128], index: 2, kind: output, shape index: {}]
  %s3 = sld [smem:[#allocation0]]
  $region30: #{tpu_custom_call.1} parent=0
    _
  %s5 = ssub.s32 1, %s3
  %s6 = scalar_select 0, %s5, %s3
  $region1: #{tpu_custom_call.1} parent=0
    #allocation2 [shape = 'u8[8192]{0}', space=vmem, size = 0x2000, scoped, tag = 'input window, operand 0, single buffered']
    #allocation3 [shape = 's32[1]{0}', space=sflag, size = 0x4, scoped, tag = 'scoped memory for tpu_custom_call.1']
    #allocation4 [shape = 's32[1]{0}', space=sflag, size = 0x4, scoped, tag = 'scoped memory for tpu_custom_call.1']
    #allocation5 [shape = 'u8[8192]{0}', space=vmem, size = 0x2000, scoped, tag = 'input window, operand 1, single buffered']
    #allocation6 [shape = 's32[1]{0}', space=sflag, size = 0x4, scoped, tag = 'scoped memory for tpu_custom_call.1']
    #allocation7 [shape = 'u8[4096]{0}', space=vmem, size = 0x1000, scoped, tag = 'output window, operand 0, single buffered']
    %7 = vsyncpa [#allocation3], 0
    %8 = vsyncpa [#allocation6], 0
    %9 = vsyncpa [#allocation4], 0
    // Predicated region
    $region2: #{tpu_custom_call.1} parent=1 // pred_check
      _
    $region3: #{tpu_custom_call.1} parent=1 // pred_check_branch
      %11 = sbr.rel (0) target = $region5
    $region4: #{tpu_custom_call.1} parent=1 // pred_region
      %s13 = ssub.s32 256, 256
      %14 = vsyncadd [#allocation3], %s13
      %s15 = sshll.u32 [#allocation2], 4
      %s16 = int_to_ptr.vmem [resolvable:$true] %s15
      %21 = dma.hbm_to_vmem [thread:$0]  %s0, 256, %s16, [#allocation3], 128, 128, 8
    $region5: #{tpu_custom_call.1} parent=1 // pred_fallthru
      _
    // Predicated region
    $region6: #{tpu_custom_call.1} parent=1 // pred_check
      _
    $region7: #{tpu_custom_call.1} parent=1 // pred_check_branch
      %23 = sbr.rel (0) target = $region9
    $region8: #{tpu_custom_call.1} parent=1 // pred_region
      %s25 = ssub.s32 256, 256
      %26 = vsyncadd [#allocation6], %s25
      %s27 = sshll.u32 [#allocation5], 4
      %s28 = int_to_ptr.vmem [resolvable:$true] %s27
      %33 = dma.hbm_to_vmem [thread:$0]  %s1, 256, %s28, [#allocation6], 128, 128, 8
    $region9: #{tpu_custom_call.1} parent=1 // pred_fallthru
      _
    // Predicated region
    $region10: #{tpu_custom_call.1} parent=1 // pred_check
      _
    $region11: #{tpu_custom_call.1} parent=1 // pred_check_branch
      %35 = sbr.rel (0) target = $region13
    $region12: #{tpu_custom_call.1} parent=1 // pred_region
      %36 = dma.done [#allocation3], 256
    $region13: #{tpu_custom_call.1} parent=1 // pred_fallthru
      _
    // Predicated region
    $region14: #{tpu_custom_call.1} parent=1 // pred_check
      _
    $region15: #{tpu_custom_call.1} parent=1 // pred_check_branch
      %38 = sbr.rel (0) target = $region17
    $region16: #{tpu_custom_call.1} parent=1 // pred_region
      %39 = dma.done [#allocation6], 256
    $region17: #{tpu_custom_call.1} parent=1 // pred_fallthru
      _
    %p40 = scmp.eq.s32.totalorder 0, 0
    // Predicated region
    $region18: #{tpu_custom_call.1} parent=1 // pred_check
      %p41 = pneg %p40
    $region19: #{tpu_custom_call.1} parent=1 // pred_check_branch
      %43 = sbr.rel (%p41) target = $region21
    $region20: #{tpu_custom_call.1} parent=1 // pred_region
      %44 = vst [vmem:[#allocation7] sm:$0xff] 0.0
    $region21: #{tpu_custom_call.1} parent=1 // pred_fallthru
      _
    %v45 = vld [vmem:[#allocation7] sm:$0xff]
    %v46 = vld [vmem:[#allocation2] sm:$0xff]
    %v47 = vld [vmem:[#allocation2 + $0x8] sm:$0xff]
    %v48 = vld [vmem:[#allocation5] sm:$0xff]
    %v49 = vld [vmem:[#allocation5 + $0x8] sm:$0xff]
    %v50 = vsub.f32 %v48, %v46
    %v51 = vsub.f32 %v49, %v47
    %v52 = vmul.f32 %v50, %v50
    %v53 = vmul.f32 %v51, %v51
    %v54 = vadd.f32 %v52, %v53
    %v55 = vadd.f32 %v45, %v54
    %56 = vst [vmem:[#allocation7] sm:$0xff] %v55
    // Predicated region
    $region22: #{tpu_custom_call.1} parent=1 // pred_check
      _
    $region23: #{tpu_custom_call.1} parent=1 // pred_check_branch
      %58 = sbr.rel (0) target = $region25
    $region24: #{tpu_custom_call.1} parent=1 // pred_region
      %s60 = ssub.s32 128, 128
      %61 = vsyncadd [#allocation4], %s60
      %s63 = sshll.u32 [#allocation7], 4
      %s64 = int_to_ptr.vmem [resolvable:$true] %s63
      %66 = dma.vmem_to_hbm [thread:$0]  %s64, 128, %s2, [#allocation4]
    $region25: #{tpu_custom_call.1} parent=1 // pred_fallthru
      _
    // Predicated region
    $region26: #{tpu_custom_call.1} parent=1 // pred_check
      _
    $region27: #{tpu_custom_call.1} parent=1 // pred_check_branch
      %68 = sbr.rel (0) target = $region29
    $region28: #{tpu_custom_call.1} parent=1 // pred_region
      %69 = dma.done [#allocation4], 128
    $region29: #{tpu_custom_call.1} parent=1 // pred_fallthru
      _
    %70 = vsyncpa [#allocation3], 1
    %71 = vsyncpa [#allocation6], 1
    %72 = vsyncpa [#allocation4], 1

</llo_original>
